<compile_context>
chip_gen: v5e
topology: v5e:2x2
jax: 0.10.0
libtpu: 0.0.40
codegen_flags: <defaults>
</compile_context>

<pallas_src>
import jax
import jax.numpy as jnp
from jax.experimental import pallas as pl
from jax.experimental.pallas import tpu as pltpu


# ----------------------------------------------------------------------------
# Kernel
# ----------------------------------------------------------------------------
def l2linear_kernel(x_ref, w_ref, b_ref, o_ref):
    """Fused (X @ W + bias_scaled) tile, accumulating directly into o_ref.

    x_ref : (tm, tk)  input tile (compute dtype, e.g. bf16)
    w_ref : (tk, tn)  weight tile (compute dtype)
    b_ref : (1,  tn)  bias tile, already multiplied by bias_factor (f32)
    o_ref : (tm, tn)  f32 output tile (resident in VMEM across the K axis)
    """
    k = pl.program_id(2)

    partial = jnp.dot(x_ref[...], w_ref[...],
                      preferred_element_type=jnp.float32)

    @pl.when(k == 0)
    def _():
        o_ref[...] = partial

    @pl.when(k > 0)
    def _():
        o_ref[...] += partial

    @pl.when(k == pl.num_programs(2) - 1)
    def _():
        o_ref[...] += b_ref[...]


# ----------------------------------------------------------------------------
# Wrapper
# ----------------------------------------------------------------------------
def _round_up(x, m):
    return ((x + m - 1) // m) * m


def make_l2linear_forward(weights, bias, bias_factor=1.0, *,
                          compute_dtype=jnp.bfloat16,
                          tm=256, tn=512, tk=1024):
    """Prepare parameters once and return a jitted forward(x) -> (M, N) f32.

    weights: (K, N) f32, bias: (N,) f32.
    compute_dtype=jnp.bfloat16 (default, ~3-4x MXU throughput) or jnp.float32
    for exact parity with the PyTorch f32 reference.
    """
    K, N = weights.shape
    assert bias.shape == (N,)

    # Tile sizes for the weight dims: (8,128)-aligned, single tile for tiny dims.
    tn = min(tn, _round_up(N, 128))
    tk = min(tk, _round_up(K, 128))
    Np, Kp = _round_up(N, tn), _round_up(K, tk)

    # One-time parameter prep (outside the per-call path): zero-pad, cast, and
    # fold bias_factor into the bias row.  Zero padding is mathematically inert.
    w_p = jnp.pad(weights, ((0, Kp - K), (0, Np - N))).astype(compute_dtype)
    b_p = (jnp.pad(bias, (0, Np - N)) * bias_factor
           ).reshape(1, -1).astype(jnp.float32)

    def forward(x):
        M, Kx = x.shape
        assert Kx == K, "X.shape[1] must equal input_width"

        # Small-batch rule: cover the whole padded batch with a single M tile
        # so W is streamed from HBM exactly once.
        tm_ = _round_up(M, 8) if M <= 512 else tm
        Mp = _round_up(M, tm_)

        xp = x
        if (Mp - M) or (Kp - K):
            xp = jnp.pad(x, ((0, Mp - M), (0, Kp - K)))
        xp = xp.astype(compute_dtype)

        grid = (Mp // tm_, Np // tn, Kp // tk)

        out = pl.pallas_call(
            l2linear_kernel,
            out_shape=jax.ShapeDtypeStruct((Mp, Np), jnp.float32),
            grid_spec=pltpu.PrefetchScalarGridSpec(
                num_scalar_prefetch=0,
                grid=grid,
                in_specs=[
                    pl.BlockSpec((tm_, tk), lambda i, j, k: (i, k)),   # X
                    pl.BlockSpec((tk, tn), lambda i, j, k: (k, j)),    # W
                    pl.BlockSpec((1, tn), lambda i, j, k: (0, j)),     # bias
                ],
                out_specs=pl.BlockSpec((tm_, tn), lambda i, j, k: (i, j)),
            ),
            compiler_params=pltpu.CompilerParams(
                dimension_semantics=("parallel", "parallel", "arbitrary")),
        )(xp, w_p, b_p)

        if Mp != M or Np != N:
            out = out[:M, :N]
        return out

    return jax.jit(forward)


# ----------------------------------------------------------------------------
# Parameter init mirroring L2Linear.__init__ (host side, not part of forward)
# ----------------------------------------------------------------------------
def init_l2linear(key, input_width, output_width):
    w = jax.random.normal(key, (input_width, output_width), dtype=jnp.float32)
    # project(orthogonal=True): U, S, V = svd(W); S <- 1; W <- U @ diag(S) @ V^T
    u, _, vh = jnp.linalg.svd(w, full_matrices=False)
    w = jnp.dot(u, vh)
    b = jnp.zeros((output_width,), jnp.float32)
    return w, b


# ----------------------------------------------------------------------------
if __name__ == "__main__":
    key = jax.random.PRNGKey(0)
    k_x, k_w, k_b = jax.random.split(key, 3)

    batch, input_width, output_width = 16, 48, 96
    bias_factor = 0.5

    x = jax.random.normal(k_x, (batch, input_width), dtype=jnp.float32)
    weights, bias = init_l2linear(k_w, input_width, output_width)
    # Use a non-zero bias (as after training) so the bias path is exercised.
    bias = 0.1 * jax.random.normal(k_b, (output_width,), dtype=jnp.float32)

    ref = jnp.dot(x, weights) + bias.reshape(1, -1) * bias_factor

    # f32 compute path: exact parity with the PyTorch f32 forward.
    fwd_f32 = make_l2linear_forward(weights, bias, bias_factor,
                                    compute_dtype=jnp.float32)
    out_f32 = jax.block_until_ready(fwd_f32(x))
    assert out_f32.shape == (batch, output_width)
    assert bool(jnp.all(jnp.isfinite(out_f32)))
    assert bool(jnp.allclose(out_f32, ref, rtol=1e-5, atol=1e-5))

    # bf16 compute path (default / fast): f32 accumulation, looser tolerance.
    fwd_bf16 = make_l2linear_forward(weights, bias, bias_factor)
    out_bf16 = jax.block_until_ready(fwd_bf16(x))
    assert out_bf16.shape == (batch, output_width)
    assert bool(jnp.all(jnp.isfinite(out_bf16)))
    assert bool(jnp.allclose(out_bf16, ref, rtol=3e-2, atol=3e-2))

    print("KERNEL_OK")
</pallas_src>

<mosaic_0001>
module attributes {stable_mosaic.version = 11 : i64} {
  func.func @l2linear_kernel(%arg0: i32, %arg1: i32, %arg2: i32, %arg3: memref<16x128xf32, #tpu.memory_space<vmem>>, %arg4: memref<128x128xf32, #tpu.memory_space<vmem>>, %arg5: memref<1x128xf32, #tpu.memory_space<vmem>>, %arg6: memref<16x128xf32, #tpu.memory_space<vmem>>) attributes {dimension_semantics = [#tpu.dimension_semantics<parallel>, #tpu.dimension_semantics<parallel>, #tpu.dimension_semantics<arbitrary>], iteration_bounds = array<i64: 1, 1, 1>, scalar_prefetch = 0 : i64, scratch_operands = 0 : i64, tpu.core_type = #tpu.core_type<tc>, window_params = [{transform_indices = @transform_0, window_bounds = array<i64: 16, 128>}, {transform_indices = @transform_1, window_bounds = array<i64: 128, 128>}, {transform_indices = @transform_2, window_bounds = array<i64: 1, 128>}, {transform_indices = @transform_3, window_bounds = array<i64: 16, 128>}]} {
    %c0 = arith.constant 0 : index
    %c0_0 = arith.constant 0 : index
    %0 = vector.load %arg3[%c0, %c0_0] : memref<16x128xf32, #tpu.memory_space<vmem>>, vector<16x128xf32>
    %c0_1 = arith.constant 0 : index
    %c0_2 = arith.constant 0 : index
    %1 = vector.load %arg4[%c0_1, %c0_2] : memref<128x128xf32, #tpu.memory_space<vmem>>, vector<128x128xf32>
    %cst = arith.constant dense<0.000000e+00> : vector<16x128xf32>
    %2 = tpu.matmul %0, %1, %cst {dimension_numbers = #tpu.dot_dimension_numbers<[1], [0], [0], [1], [0, 0, 1, 1], [], []>} : vector<16x128xf32>, vector<128x128xf32>, vector<16x128xf32> -> vector<16x128xf32>
    %c0_i32 = arith.constant 0 : i32
    %3 = arith.cmpi eq, %arg2, %c0_i32 : i32
    %4 = arith.extui %3 : i1 to i32
    %c0_i32_3 = arith.constant 0 : i32
    %5 = arith.cmpi ne, %4, %c0_i32_3 : i32
    scf.if %5 {
      %c0_8 = arith.constant 0 : index
      %c0_9 = arith.constant 0 : index
      %12 = vector.load %arg6[%c0_8, %c0_9] : memref<16x128xf32, #tpu.memory_space<vmem>>, vector<16x128xf32>
      tpu.vector_store %arg6[%c0_8, %c0_9], %2 {strides = array<i32>} : memref<16x128xf32, #tpu.memory_space<vmem>>, vector<16x128xf32>,
    } else {
    }
    %c0_i32_4 = arith.constant 0 : i32
    %6 = arith.cmpi sgt, %arg2, %c0_i32_4 : i32
    %7 = arith.extui %6 : i1 to i32
    %c0_i32_5 = arith.constant 0 : i32
    %8 = arith.cmpi ne, %7, %c0_i32_5 : i32
    scf.if %8 {
      %c0_8 = arith.constant 0 : index
      %c0_9 = arith.constant 0 : index
      %12 = vector.load %arg6[%c0_8, %c0_9] : memref<16x128xf32, #tpu.memory_space<vmem>>, vector<16x128xf32>
      %13 = arith.addf %12, %2 : vector<16x128xf32>
      %c0_10 = arith.constant 0 : index
      %c0_11 = arith.constant 0 : index
      %14 = vector.load %arg6[%c0_10, %c0_11] : memref<16x128xf32, #tpu.memory_space<vmem>>, vector<16x128xf32>
      tpu.vector_store %arg6[%c0_10, %c0_11], %13 {strides = array<i32>} : memref<16x128xf32, #tpu.memory_space<vmem>>, vector<16x128xf32>,
    } else {
    }
    %c0_i32_6 = arith.constant 0 : i32
    %9 = arith.cmpi eq, %arg2, %c0_i32_6 : i32
    %10 = arith.extui %9 : i1 to i32
    %c0_i32_7 = arith.constant 0 : i32
    %11 = arith.cmpi ne, %10, %c0_i32_7 : i32
    scf.if %11 {
      %c0_8 = arith.constant 0 : index
      %c0_9 = arith.constant 0 : index
      %12 = vector.load %arg6[%c0_8, %c0_9] : memref<16x128xf32, #tpu.memory_space<vmem>>, vector<16x128xf32>
      %c0_10 = arith.constant 0 : index
      %c0_11 = arith.constant 0 : index
      %13 = vector.load %arg5[%c0_10, %c0_11] : memref<1x128xf32, #tpu.memory_space<vmem>>, vector<1x128xf32>
      %14 = vector.broadcast %13 : vector<1x128xf32> to vector<16x128xf32>
      %15 = arith.addf %12, %14 : vector<16x128xf32>
      %c0_12 = arith.constant 0 : index
      %c0_13 = arith.constant 0 : index
      %16 = vector.load %arg6[%c0_12, %c0_13] : memref<16x128xf32, #tpu.memory_space<vmem>>, vector<16x128xf32>
      tpu.vector_store %arg6[%c0_12, %c0_13], %15 {strides = array<i32>} : memref<16x128xf32, #tpu.memory_space<vmem>>, vector<16x128xf32>,
    } else {
    }
    return
  }
  func.func @transform_0(%arg0: i32, %arg1: i32, %arg2: i32) -> (i32, i32) {
    %c0_i32 = arith.constant 0 : i32
    return %arg0, %arg2 : i32, i32
  }
  func.func @transform_1(%arg0: i32, %arg1: i32, %arg2: i32) -> (i32, i32) {
    %c0_i32 = arith.constant 0 : i32
    return %arg2, %arg1 : i32, i32
  }
  func.func @transform_2(%arg0: i32, %arg1: i32, %arg2: i32) -> (i32, i32) {
    %c0_i32 = arith.constant 0 : i32
    %c0_i32_0 = arith.constant 0 : i32
    return %c0_i32, %arg1 : i32, i32
  }
  func.func @transform_3(%arg0: i32, %arg1: i32, %arg2: i32) -> (i32, i32) {
    %c0_i32 = arith.constant 0 : i32
    return %arg0, %arg1 : i32, i32
  }
}

</mosaic_0001>

<llo_original>
// kernel: forward.1
$region0: #{forward.1}
  #allocation0 [shape = 'u32[]', space=smem, size = 0x4, offset = 0x4, fixed_abs, tag = 'smem constant byte address 0x4 - core index']
  #allocation1 [shape = 'u32[72,128]{1,0:T(1,128)}', space=vmem, size = 0x9000, scoped, tag = 'internal scratch']
  %s0 = inlined_call_operand.vmem [shape: f32[16,128], index: 0, kind: input, shape index: {}]
  %s1 = inlined_call_operand.hbm [shape: f32[128,128], index: 1, kind: input, shape index: {}]
  %s2 = inlined_call_operand.vmem [shape: f32[1,128], index: 2, kind: input, shape index: {}]
  %s3 = inlined_call_operand.hbm [shape: f32[16,128], index: 3, kind: output, shape index: {}]
  %s4 = sld [smem:[#allocation0]]
  $region38: #{forward.1} parent=0
    _
  %s6 = ssub.s32 1, %s4
  %s7 = scalar_select 0, %s6, %s4
  $region1: #{forward.1} parent=0
    #allocation2 [shape = 'u8[65536]{0}', space=vmem, size = 0x10000, scoped, tag = 'input window, operand 1, single buffered']
    #allocation3 [shape = 's32[1]{0}', space=sflag, size = 0x4, scoped, tag = 'scoped memory for forward.1']
    #allocation4 [shape = 's32[1]{0}', space=sflag, size = 0x4, scoped, tag = 'scoped memory for forward.1']
    #allocation5 [shape = 'u8[8192]{0}', space=vmem, size = 0x2000, scoped, tag = 'output window, operand 0, single buffered']
    %8 = vsyncpa [#allocation3], 0
    %9 = vsyncpa [#allocation4], 0
    // Predicated region
    $region2: #{forward.1} parent=1 // pred_check
      _
    $region3: #{forward.1} parent=1 // pred_check_branch
      %11 = sbr.rel (0) target = $region5
    $region4: #{forward.1} parent=1 // pred_region
      _
    $region5: #{forward.1} parent=1 // pred_fallthru
      _
    // Predicated region
    $region6: #{forward.1} parent=1 // pred_check
      _
    $region7: #{forward.1} parent=1 // pred_check_branch
      %13 = sbr.rel (0) target = $region9
    $region8: #{forward.1} parent=1 // pred_region
      %15 = vsyncadd [#allocation3], 0
      %s16 = sshll.u32 %s1, 4
      %s17 = int_to_ptr.hbm [resolvable:$true] %s16
      %s18 = sshll.u32 [#allocation2], 4
      %s19 = int_to_ptr.vmem [resolvable:$true] %s18
      %24 = dma.hbm_to_vmem [thread:$0]  %s17, 2048, %s19, [#allocation3], 128, 128, 8
    $region9: #{forward.1} parent=1 // pred_fallthru
      _
    // Predicated region
    $region10: #{forward.1} parent=1 // pred_check
      _
    $region11: #{forward.1} parent=1 // pred_check_branch
      %26 = sbr.rel (0) target = $region13
    $region12: #{forward.1} parent=1 // pred_region
      _
    $region13: #{forward.1} parent=1 // pred_fallthru
      _
    // Predicated region
    $region14: #{forward.1} parent=1 // pred_check
      _
    $region15: #{forward.1} parent=1 // pred_check_branch
      %28 = sbr.rel (0) target = $region17
    $region16: #{forward.1} parent=1 // pred_region
      %30 = dma.done [#allocation3], 2048
    $region17: #{forward.1} parent=1 // pred_fallthru
      _
    %v31 = vld [vmem:[%s0] sm:$0xff]
    %v32 = vld [vmem:[%s0 + $0x8] sm:$0xff]
    %v33 = vld [vmem:[#allocation2] sm:$0xff]
    %v34 = vld [vmem:[#allocation2 + $0x8] sm:$0xff]
    %v35 = vld [vmem:[#allocation2 + $0x10] sm:$0xff]
    %v36 = vld [vmem:[#allocation2 + $0x18] sm:$0xff]
    %v37 = vld [vmem:[#allocation2 + $0x20] sm:$0xff]
    %v38 = vld [vmem:[#allocation2 + $0x28] sm:$0xff]
    %v39 = vld [vmem:[#allocation2 + $0x30] sm:$0xff]
    %v40 = vld [vmem:[#allocation2 + $0x38] sm:$0xff]
    %v41 = vld [vmem:[#allocation2 + $0x40] sm:$0xff]
    %v42 = vld [vmem:[#allocation2 + $0x48] sm:$0xff]
    %v43 = vld [vmem:[#allocation2 + $0x50] sm:$0xff]
    %v44 = vld [vmem:[#allocation2 + $0x58] sm:$0xff]
    %v45 = vld [vmem:[#allocation2 + $0x60] sm:$0xff]
    %v46 = vld [vmem:[#allocation2 + $0x68] sm:$0xff]
    %v47 = vld [vmem:[#allocation2 + $0x70] sm:$0xff]
    %v48 = vld [vmem:[#allocation2 + $0x78] sm:$0xff]
    %49 = vmatpush.msra.mxu0 %v48
    %50 = vmatpush.msra.mxu0 %v47
    %51 = vmatpush.msra.mxu0 %v46
    %52 = vmatpush.msra.mxu0 %v45
    %53 = vmatpush.msra.mxu0 %v44
    %54 = vmatpush.msra.mxu0 %v43
    %55 = vmatpush.msra.mxu0 %v42
    %56 = vmatpush.msra.mxu0 %v41
    %57 = vmatpush.msra.mxu0 %v40
    %58 = vmatpush.msra.mxu0 %v39
    %59 = vmatpush.msra.mxu0 %v38
    %60 = vmatpush.msra.mxu0 %v37
    %61 = vmatpush.msra.mxu0 %v36
    %62 = vmatpush.msra.mxu0 %v35
    %63 = vmatpush.msra.mxu0 %v34
    %64 = vmatpush.msra.mxu0 %v33
    %65 = vmatmul.f32.gmra.mxu0 %v31
    %v66 = vpop.f32.mrf.mxu0
    %v67 = vadd.f32 0.0, %v66
    %68 = vmatmul.f32.gmra.mxu0 %v32
    %v69 = vpop.f32.mrf.mxu0
    %v70 = vadd.f32 0.0, %v69
    %71 = vdwg.mxu0
    %p72 = scmp.eq.s32.totalorder 0, 0
    // Predicated region
    $region18: #{forward.1} parent=1 // pred_check
      %p73 = pneg %p72
    $region19: #{forward.1} parent=1 // pred_check_branch
      %75 = sbr.rel (%p73) target = $region21
    $region20: #{forward.1} parent=1 // pred_region
      %76 = vst [vmem:[#allocation5] sm:$0xff] %v67
      %77 = vst [vmem:[#allocation5 + $0x8] sm:$0xff] %v70
    $region21: #{forward.1} parent=1 // pred_fallthru
      _
    %p78 = scmp.gt.s32.totalorder 0, 0
    // Predicated region
    $region22: #{forward.1} parent=1 // pred_check
      %p79 = pneg %p78
    $region23: #{forward.1} parent=1 // pred_check_branch
      %81 = sbr.rel (%p79) target = $region25
    $region24: #{forward.1} parent=1 // pred_region
      %v82 = vld [vmem:[#allocation5] sm:$0xff]
      %v83 = vld [vmem:[#allocation5 + $0x8] sm:$0xff]
      %v84 = vadd.f32 %v82, %v67
      %v85 = vadd.f32 %v83, %v70
      %86 = vst [vmem:[#allocation5] sm:$0xff] %v84
      %87 = vst [vmem:[#allocation5 + $0x8] sm:$0xff] %v85
    $region25: #{forward.1} parent=1 // pred_fallthru
      _
    // Predicated region
    $region26: #{forward.1} parent=1 // pred_check
      %p88 = pneg %p72
    $region27: #{forward.1} parent=1 // pred_check_branch
      %90 = sbr.rel (%p88) target = $region29
    $region28: #{forward.1} parent=1 // pred_region
      %v91 = vld [vmem:[#allocation5] sm:$0xff]
      %v92 = vld [vmem:[#allocation5 + $0x8] sm:$0xff]
      %v93 = vld [vmem:[%s2] sm:$0x1]
      %v95 = vperm.slane %v93, 0
      %v97 = vadd.f32 %v91, %v95
      %v98 = vadd.f32 %v92, %v95
      %99 = vst [vmem:[#allocation5] sm:$0xff] %v97
      %100 = vst [vmem:[#allocation5 + $0x8] sm:$0xff] %v98
    $region29: #{forward.1} parent=1 // pred_fallthru
      _
    // Predicated region
    $region30: #{forward.1} parent=1 // pred_check
      _
    $region31: #{forward.1} parent=1 // pred_check_branch
      %102 = sbr.rel (0) target = $region33
    $region32: #{forward.1} parent=1 // pred_region
      %104 = vsyncadd [#allocation4], 0
      %s105 = sshll.u32 [#allocation5], 4
      %s106 = int_to_ptr.vmem [resolvable:$true] %s105
      %s107 = sshll.u32 %s3, 4
      %s108 = int_to_ptr.hbm [resolvable:$true] %s107
      %113 = dma.vmem_to_hbm [thread:$0]  %s106, 256, %s108, [#allocation4], 128, 128, 8
    $region33: #{forward.1} parent=1 // pred_fallthru
      _
    // Predicated region
    $region34: #{forward.1} parent=1 // pred_check
      _
    $region35: #{forward.1} parent=1 // pred_check_branch
      %115 = sbr.rel (0) target = $region37
    $region36: #{forward.1} parent=1 // pred_region
      %117 = dma.done [#allocation4], 256
    $region37: #{forward.1} parent=1 // pred_fallthru
      _
    %118 = vsyncpa [#allocation3], 1
    %119 = vsyncpa [#allocation4], 1

</llo_original>
